<compile_context>
chip_gen: v6e
topology: v6e:2x2x1
jax: 0.10.0
libtpu: 0.0.40
codegen_flags: <defaults>
</compile_context>

<pallas_src>
import jax
import jax.numpy as jnp
from jax.experimental import pallas as pl
from jax.experimental.pallas import tpu as pltpu


_TRANS_B = (((1,), (1,)), ((), ()))  # contract last dims: (8, K) x (TM, K) -> (8, TM)


def _round_up(x, m):
    return ((x + m - 1) // m) * m


def mlp_kernel(x_ref, w1_ref, b1_ref, w2_ref, b2_ref, w3_ref, eye_ref, b3_ref, o_ref):
    # x arrives as f32 straight from HBM; cast to bf16 in VMEM for the MXU.
    x = x_ref[...].astype(jnp.bfloat16)

    # Layer 1: Linear + fused bias/ReLU/cast (only the bf16 intermediate is materialized).
    h1 = jnp.dot(x, w1_ref[...], preferred_element_type=jnp.float32)
    h1 = jnp.maximum(h1 + b1_ref[...], 0.0).astype(jnp.bfloat16)

    # Layer 2: Linear + fused bias/ReLU/cast.
    h2 = jnp.dot(h1, w2_ref[...], preferred_element_type=jnp.float32)
    h2 = jnp.maximum(h2 + b2_ref[...], 0.0).astype(jnp.bfloat16)

    # Output layer (out_dim == 1), lane-dense without transposing the (TM, 128) h2:
    #   small (TM, 8): every column equals h2 @ w3 (w3 replicated over 8 columns),
    #   out8  (8, TM): identity trans-B "transpose" of only the tiny (TM, 8) operand,
    #   so the per-tile result is a (1, TM) lane-dense row (unmasked full-vreg stores).
    small = jnp.dot(h2, w3_ref[...], preferred_element_type=jnp.float32)            # (TM, 8)
    out8 = jax.lax.dot_general(eye_ref[...], small.astype(jnp.bfloat16), _TRANS_B,
                               preferred_element_type=jnp.float32)                  # (8, TM)
    out_row = out8[0:1, :] + b3_ref[...]          # (1, TM) f32; b3 is (1, 1)
    o_ref[...] = out_row.reshape(o_ref.shape)     # (1, 1, TM)


def mlp_forward(x, params, tile_m=4096):
    """x: [B, input_dim] float32. params: dict of w1,b1,w2,b2,w3,b3 ([in, out] weights)."""
    w1, b1, w2, b2, w3, b3 = (params[k] for k in ("w1", "b1", "w2", "b2", "w3", "b3"))
    B, D = x.shape
    H1, H2 = w1.shape[1], w2.shape[1]

    # --- batch tile selection --------------------------------------------------------------
    # Multiple of 128 so the (1, tm) output row is lane-aligned (no masked vst.msk stores).
    tm = min(_round_up(tile_m, 128), _round_up(B, 128))
    # v7x megacore: guarantee >= 2 grid tiles when the batch allows it, so the "parallel"
    # batch axis can be split across both TensorCores.
    if B >= 256:
        tm = min(tm, _round_up(pl.cdiv(B, 2), 128))
    # Portable VMEM budget (v7x: 64 MiB physical / 32 MiB default scoped): dominant per-row
    # bytes ~ f32 x tile double-buffered + f32/bf16 hidden intermediates.
    bytes_per_row = 8 * D + 6 * (H1 + H2) + 256
    tm_cap = max(128, ((24 << 20) // bytes_per_row // 128) * 128)
    tm = max(128, min(tm, tm_cap))
    num_tiles = pl.cdiv(B, tm)

    # Resident (VMEM) weights: bf16 matmul operands, f32 biases. These casts touch only the
    # tiny weight tensors; x itself is streamed untouched.
    w1_bf = w1.astype(jnp.bfloat16)
    w2_bf = w2.astype(jnp.bfloat16)
    w3_rep = jnp.broadcast_to(w3, (H2, 8)).astype(jnp.bfloat16)   # (H2, 8), columns identical
    eye8 = jnp.eye(8, dtype=jnp.bfloat16)                         # tiny trans-B "transposer"

    def resident(arr):  # full-array block, constant block index -> stays in VMEM across steps
        zeros = (0,) * arr.ndim
        return pl.BlockSpec(arr.shape, lambda i: zeros)

    out = pl.pallas_call(
        mlp_kernel,
        out_shape=jax.ShapeDtypeStruct((num_tiles, 1, tm), jnp.float32),
        grid=(num_tiles,),
        in_specs=[
            pl.BlockSpec((tm, D), lambda i: (i, 0)),   # x: streamed f32 tiles (cast in-kernel)
            resident(w1_bf), resident(b1),
            resident(w2_bf), resident(b2),
            resident(w3_rep), resident(eye8), resident(b3),
        ],
        out_specs=pl.BlockSpec((1, 1, tm), lambda i: (i, 0, 0)),   # lane-dense output rows
        compiler_params=pltpu.CompilerParams(
            dimension_semantics=("parallel",),          # v7x: shard batch tiles over both TCs
        ),
    )(x, w1_bf, b1, w2_bf, b2, w3_rep, eye8, b3)

    # Rows beyond B in the last (partial) tile are garbage from out-of-bounds reads of x;
    # they never mix with valid rows (row-independent math) and are sliced off here.
    return out.reshape(num_tiles * tm, 1)[:B]


def init_params(key, input_dim, hidden_layers=(128, 128)):
    """Deterministic init mimicking nn.Linear (uniform +/- 1/sqrt(fan_in)).
    Weights stored [in, out] (transposed vs. PyTorch) so each layer is y = x @ W + b."""
    params = {}
    dims = [input_dim] + list(hidden_layers) + [1]
    for idx, (d_in, d_out) in enumerate(zip(dims[:-1], dims[1:]), start=1):
        key, kw, kb = jax.random.split(key, 3)
        bound = 1.0 / jnp.sqrt(d_in)
        params[f"w{idx}"] = jax.random.uniform(kw, (d_in, d_out), jnp.float32, -bound, bound)
        params[f"b{idx}"] = jax.random.uniform(kb, (1, d_out), jnp.float32, -bound, bound)
    return params


def mlp_reference(x, params):
    h = jnp.maximum(x @ params["w1"] + params["b1"], 0.0)
    h = jnp.maximum(h @ params["w2"] + params["b2"], 0.0)
    return h @ params["w3"] + params["b3"]


if __name__ == "__main__":
    key = jax.random.PRNGKey(0)
    key, kx = jax.random.split(key)

    batch, input_dim = 16, 32
    params = init_params(key, input_dim, hidden_layers=(128, 128))
    x = jax.random.normal(kx, (batch, input_dim), jnp.float32)

    # Full batch.
    y = jax.block_until_ready(mlp_forward(x, params))
    y_ref = mlp_reference(x, params)
    assert y.shape == (batch, 1)
    # bf16 matmul operands (f32 accumulation) -> loose-ish tolerance vs. pure-f32 reference.
    assert jnp.allclose(y, y_ref, atol=5e-2, rtol=5e-2), "mismatch vs reference (even batch)"

    # Ragged batch: exercises the partial last tile (OOB reads) and trailing-row slice.
    y2 = jax.block_until_ready(mlp_forward(x[:13], params))
    assert y2.shape == (13, 1)
    assert jnp.allclose(y2, y_ref[:13], atol=5e-2, rtol=5e-2), "mismatch vs reference (ragged batch)"

    print("KERNEL_OK")
</pallas_src>

<mosaic_0001>
module attributes {stable_mosaic.version = 11 : i64} {
  func.func @mlp_kernel(%arg0: i32, %arg1: memref<128x32xf32, #tpu.memory_space<vmem>>, %arg2: memref<32x128xbf16, #tpu.memory_space<vmem>>, %arg3: memref<1x128xf32, #tpu.memory_space<vmem>>, %arg4: memref<128x128xbf16, #tpu.memory_space<vmem>>, %arg5: memref<1x128xf32, #tpu.memory_space<vmem>>, %arg6: memref<128x8xbf16, #tpu.memory_space<vmem>>, %arg7: memref<8x8xbf16, #tpu.memory_space<vmem>>, %arg8: memref<1x1xf32, #tpu.memory_space<vmem>>, %arg9: memref<1x1x128xf32, #tpu.memory_space<vmem>>) attributes {dimension_semantics = [#tpu.dimension_semantics<parallel>], iteration_bounds = array<i64: 1>, scalar_prefetch = 0 : i64, scratch_operands = 0 : i64, tpu.core_type = #tpu.core_type<tc>, window_params = [{transform_indices = @transform_0, window_bounds = array<i64: 128, 32>}, {pipeline_mode = #tpu.pipeline_mode<synchronous>, transform_indices = @transform_1, window_bounds = array<i64: 32, 128>}, {pipeline_mode = #tpu.pipeline_mode<synchronous>, transform_indices = @transform_2, window_bounds = array<i64: 1, 128>}, {pipeline_mode = #tpu.pipeline_mode<synchronous>, transform_indices = @transform_3, window_bounds = array<i64: 128, 128>}, {pipeline_mode = #tpu.pipeline_mode<synchronous>, transform_indices = @transform_4, window_bounds = array<i64: 1, 128>}, {pipeline_mode = #tpu.pipeline_mode<synchronous>, transform_indices = @transform_5, window_bounds = array<i64: 128, 8>}, {pipeline_mode = #tpu.pipeline_mode<synchronous>, transform_indices = @transform_6, window_bounds = array<i64: 8, 8>}, {pipeline_mode = #tpu.pipeline_mode<synchronous>, transform_indices = @transform_7, window_bounds = array<i64: 1, 1>}, {transform_indices = @transform_8, window_bounds = array<i64: 1, 1, 128>}]} {
    %c0 = arith.constant 0 : index
    %c0_0 = arith.constant 0 : index
    %0 = vector.load %arg1[%c0, %c0_0] : memref<128x32xf32, #tpu.memory_space<vmem>>, vector<128x32xf32>
    %1 = arith.truncf %0 : vector<128x32xf32> to vector<128x32xbf16>
    %c0_1 = arith.constant 0 : index
    %c0_2 = arith.constant 0 : index
    %2 = vector.load %arg2[%c0_1, %c0_2] : memref<32x128xbf16, #tpu.memory_space<vmem>>, vector<32x128xbf16>
    %cst = arith.constant dense<0.000000e+00> : vector<128x128xf32>
    %3 = tpu.matmul %1, %2, %cst {dimension_numbers = #tpu.dot_dimension_numbers<[1], [0], [0], [1], [0, 0, 1, 1], [], []>} : vector<128x32xbf16>, vector<32x128xbf16>, vector<128x128xf32> -> vector<128x128xf32>
    %c0_3 = arith.constant 0 : index
    %c0_4 = arith.constant 0 : index
    %4 = vector.load %arg3[%c0_3, %c0_4] : memref<1x128xf32, #tpu.memory_space<vmem>>, vector<1x128xf32>
    %5 = vector.broadcast %4 : vector<1x128xf32> to vector<128x128xf32>
    %6 = arith.addf %3, %5 : vector<128x128xf32>
    %cst_5 = arith.constant 0.000000e+00 : f32
    %7 = vector.broadcast %cst_5 : f32 to vector<128x128xf32>
    %8 = arith.maximumf %6, %7 : vector<128x128xf32>
    %9 = arith.truncf %8 : vector<128x128xf32> to vector<128x128xbf16>
    %c0_6 = arith.constant 0 : index
    %c0_7 = arith.constant 0 : index
    %10 = vector.load %arg4[%c0_6, %c0_7] : memref<128x128xbf16, #tpu.memory_space<vmem>>, vector<128x128xbf16>
    %cst_8 = arith.constant dense<0.000000e+00> : vector<128x128xf32>
    %11 = tpu.matmul %9, %10, %cst_8 {dimension_numbers = #tpu.dot_dimension_numbers<[1], [0], [0], [1], [0, 0, 1, 1], [], []>} : vector<128x128xbf16>, vector<128x128xbf16>, vector<128x128xf32> -> vector<128x128xf32>
    %c0_9 = arith.constant 0 : index
    %c0_10 = arith.constant 0 : index
    %12 = vector.load %arg5[%c0_9, %c0_10] : memref<1x128xf32, #tpu.memory_space<vmem>>, vector<1x128xf32>
    %13 = vector.broadcast %12 : vector<1x128xf32> to vector<128x128xf32>
    %14 = arith.addf %11, %13 : vector<128x128xf32>
    %cst_11 = arith.constant 0.000000e+00 : f32
    %15 = vector.broadcast %cst_11 : f32 to vector<128x128xf32>
    %16 = arith.maximumf %14, %15 : vector<128x128xf32>
    %17 = arith.truncf %16 : vector<128x128xf32> to vector<128x128xbf16>
    %c0_12 = arith.constant 0 : index
    %c0_13 = arith.constant 0 : index
    %18 = vector.load %arg6[%c0_12, %c0_13] : memref<128x8xbf16, #tpu.memory_space<vmem>>, vector<128x8xbf16>
    %cst_14 = arith.constant dense<0.000000e+00> : vector<128x8xf32>
    %19 = tpu.matmul %17, %18, %cst_14 {dimension_numbers = #tpu.dot_dimension_numbers<[1], [0], [0], [1], [0, 0, 1, 1], [], []>} : vector<128x128xbf16>, vector<128x8xbf16>, vector<128x8xf32> -> vector<128x8xf32>
    %c0_15 = arith.constant 0 : index
    %c0_16 = arith.constant 0 : index
    %20 = vector.load %arg7[%c0_15, %c0_16] : memref<8x8xbf16, #tpu.memory_space<vmem>>, vector<8x8xbf16>
    %21 = arith.truncf %19 : vector<128x8xf32> to vector<128x8xbf16>
    %cst_17 = arith.constant dense<0.000000e+00> : vector<8x128xf32>
    %22 = tpu.matmul %20, %21, %cst_17 {dimension_numbers = #tpu.dot_dimension_numbers<[1], [1], [0], [0], [0, 0, 1, 0], [], []>} : vector<8x8xbf16>, vector<128x8xbf16>, vector<8x128xf32> -> vector<8x128xf32>
    %23 = vector.extract_strided_slice %22 {offsets = [0, 0], sizes = [1, 128], strides = [1, 1]} : vector<8x128xf32> to vector<1x128xf32>
    %c0_18 = arith.constant 0 : index
    %c0_19 = arith.constant 0 : index
    %24 = vector.load %arg8[%c0_18, %c0_19] : memref<1x1xf32, #tpu.memory_space<vmem>>, vector<1x1xf32>
    %25 = vector.broadcast %24 : vector<1x1xf32> to vector<1x128xf32>
    %26 = arith.addf %23, %25 : vector<1x128xf32>
    %27 = vector.shape_cast %26 : vector<1x128xf32> to vector<1x1x128xf32>
    %c0_20 = arith.constant 0 : index
    %c0_21 = arith.constant 0 : index
    %c0_22 = arith.constant 0 : index
    %28 = vector.load %arg9[%c0_20, %c0_21, %c0_22] : memref<1x1x128xf32, #tpu.memory_space<vmem>>, vector<1x1x128xf32>
    tpu.vector_store %arg9[%c0_20, %c0_21, %c0_22], %27 {strides = array<i32>} : memref<1x1x128xf32, #tpu.memory_space<vmem>>, vector<1x1x128xf32>,
    return
  }
  func.func @transform_0(%arg0: i32) -> (i32, i32) {
    %c0_i32 = arith.constant 0 : i32
    %c0_i32_0 = arith.constant 0 : i32
    return %arg0, %c0_i32 : i32, i32
  }
  func.func @transform_1(%arg0: i32) -> (i32, i32) {
    %c0_i32 = arith.constant 0 : i32
    %c0_i32_0 = arith.constant 0 : i32
    %c0_i32_1 = arith.constant 0 : i32
    return %c0_i32, %c0_i32_0 : i32, i32
  }
  func.func @transform_2(%arg0: i32) -> (i32, i32) {
    %c0_i32 = arith.constant 0 : i32
    %c0_i32_0 = arith.constant 0 : i32
    %c0_i32_1 = arith.constant 0 : i32
    return %c0_i32, %c0_i32_0 : i32, i32
  }
  func.func @transform_3(%arg0: i32) -> (i32, i32) {
    %c0_i32 = arith.constant 0 : i32
    %c0_i32_0 = arith.constant 0 : i32
    %c0_i32_1 = arith.constant 0 : i32
    return %c0_i32, %c0_i32_0 : i32, i32
  }
  func.func @transform_4(%arg0: i32) -> (i32, i32) {
    %c0_i32 = arith.constant 0 : i32
    %c0_i32_0 = arith.constant 0 : i32
    %c0_i32_1 = arith.constant 0 : i32
    return %c0_i32, %c0_i32_0 : i32, i32
  }
  func.func @transform_5(%arg0: i32) -> (i32, i32) {
    %c0_i32 = arith.constant 0 : i32
    %c0_i32_0 = arith.constant 0 : i32
    %c0_i32_1 = arith.constant 0 : i32
    return %c0_i32, %c0_i32_0 : i32, i32
  }
  func.func @transform_6(%arg0: i32) -> (i32, i32) {
    %c0_i32 = arith.constant 0 : i32
    %c0_i32_0 = arith.constant 0 : i32
    %c0_i32_1 = arith.constant 0 : i32
    return %c0_i32, %c0_i32_0 : i32, i32
  }
  func.func @transform_7(%arg0: i32) -> (i32, i32) {
    %c0_i32 = arith.constant 0 : i32
    %c0_i32_0 = arith.constant 0 : i32
    %c0_i32_1 = arith.constant 0 : i32
    return %c0_i32, %c0_i32_0 : i32, i32
  }
  func.func @transform_8(%arg0: i32) -> (i32, i32, i32) {
    %c0_i32 = arith.constant 0 : i32
    %c0_i32_0 = arith.constant 0 : i32
    %c0_i32_1 = arith.constant 0 : i32
    return %arg0, %c0_i32, %c0_i32_0 : i32, i32, i32
  }
}

</mosaic_0001>

<llo_original>
// kernel: tpu_custom_call.1
$region0: #{tpu_custom_call.1}
  #allocation0 [shape = 'u32[]', space=smem, size = 0x4, offset = 0x4, fixed_abs, tag = 'smem constant byte address 0x4 - core index']
  #allocation1 [shape = 'u32[144,128]{1,0:T(1,128)}', space=vmem, size = 0x12000, scoped, tag = 'internal scratch']
  #allocation2 [shape = 'f32[1,1]{1,0:T(1,128)S(1)}', space=vmem, size = 0x200, scoped, tag = 'scoped memory for tpu_custom_call.1']
  %s0 = inlined_call_operand.hbm [shape: f32[16,32], index: 0, kind: input, shape index: {}]
  %s1 = inlined_call_operand.hbm [shape: bf16[32,128], index: 1, kind: input, shape index: {}]
  %s2 = inlined_call_operand.vmem [shape: f32[1,128], index: 2, kind: input, shape index: {}]
  %s3 = inlined_call_operand.vmem [shape: bf16[128,128], index: 3, kind: input, shape index: {}]
  %s4 = inlined_call_operand.vmem [shape: f32[1,128], index: 4, kind: input, shape index: {}]
  %s5 = inlined_call_operand.vmem [shape: bf16[128,8], index: 5, kind: input, shape index: {}]
  %s6 = inlined_call_operand.vmem [shape: bf16[8,8], index: 6, kind: input, shape index: {}]
  %s7 = inlined_call_operand.<no memory space> [shape: f32[1,1], index: 7, kind: input, shape index: {}]
  %s8 = inlined_call_operand.hbm [shape: f32[1,1,128], index: 8, kind: output, shape index: {}]
  %s9 = sld [smem:[#allocation0]]
  $region50: #{tpu_custom_call.1} parent=0
    _
  %s11 = ssub.s32 1, %s9
  %s12 = scalar_select 0, %s11, %s9
  %v13 = vstv %s7
  %14 = vst [vmem:[#allocation2] sm:$0x1] %v13
  $region1: #{tpu_custom_call.1} parent=0
    #allocation3 [shape = 'u8[65536]{0}', space=vmem, size = 0x10000, scoped, tag = 'input window, operand 0, single buffered']
    #allocation4 [shape = 's32[1]{0}', space=sflag, size = 0x4, scoped, tag = 'scoped memory for tpu_custom_call.1']
    #allocation5 [shape = 's32[1]{0}', space=sflag, size = 0x4, scoped, tag = 'scoped memory for tpu_custom_call.1']
    #allocation6 [shape = 'u8[8192]{0}', space=vmem, size = 0x2000, scoped, tag = 'input window, operand 1, single buffered']
    #allocation7 [shape = 's32[1]{0}', space=sflag, size = 0x4, scoped, tag = 'scoped memory for tpu_custom_call.1']
    #allocation8 [shape = 'u8[512]{0}', space=vmem, size = 0x400, scoped, tag = 'output window, operand 0, single buffered']
    %15 = vsyncpa [#allocation4], 0
    %16 = vsyncpa [#allocation7], 0
    %17 = vsyncpa [#allocation5], 0
    // Predicated region
    $region2: #{tpu_custom_call.1} parent=1 // pred_check
      _
    $region3: #{tpu_custom_call.1} parent=1 // pred_check_branch
      %19 = sbr.rel (0) target = $region5
    $region4: #{tpu_custom_call.1} parent=1 // pred_region
      %s21 = ssub.s32 2048, 256
      %22 = vsyncadd [#allocation4], %s21
      %s23 = sshll.u32 [#allocation3], 4
      %s24 = int_to_ptr.vmem [resolvable:$true] %s23
      %29 = dma.hbm_to_vmem [thread:$0]  %s0, 256, %s24, [#allocation4], 128, 128, 8
    $region5: #{tpu_custom_call.1} parent=1 // pred_fallthru
      _
    // Predicated region
    $region6: #{tpu_custom_call.1} parent=1 // pred_check
      _
    $region7: #{tpu_custom_call.1} parent=1 // pred_check_branch
      %31 = sbr.rel (0) target = $region9
    $region8: #{tpu_custom_call.1} parent=1 // pred_region
      %s33 = ssub.s32 256, 256
      %34 = vsyncadd [#allocation7], %s33
      %s35 = sshll.u32 [#allocation6], 4
      %s36 = int_to_ptr.vmem [resolvable:$true] %s35
      %41 = dma.hbm_to_vmem [thread:$0]  %s1, 256, %s36, [#allocation7], 64, 64, 4
    $region9: #{tpu_custom_call.1} parent=1 // pred_fallthru
      _
    // Predicated region
    $region10: #{tpu_custom_call.1} parent=1 // pred_check
      _
    $region11: #{tpu_custom_call.1} parent=1 // pred_check_branch
      %43 = sbr.rel (0) target = $region13
    $region12: #{tpu_custom_call.1} parent=1 // pred_region
      _
    $region13: #{tpu_custom_call.1} parent=1 // pred_fallthru
      _
    // Predicated region
    $region14: #{tpu_custom_call.1} parent=1 // pred_check
      _
    $region15: #{tpu_custom_call.1} parent=1 // pred_check_branch
      %45 = sbr.rel (0) target = $region17
    $region16: #{tpu_custom_call.1} parent=1 // pred_region
      _
    $region17: #{tpu_custom_call.1} parent=1 // pred_fallthru
      _
    // Predicated region
    $region18: #{tpu_custom_call.1} parent=1 // pred_check
      _
    $region19: #{tpu_custom_call.1} parent=1 // pred_check_branch
      %47 = sbr.rel (0) target = $region21
    $region20: #{tpu_custom_call.1} parent=1 // pred_region
      _
    $region21: #{tpu_custom_call.1} parent=1 // pred_fallthru
      _
    // Predicated region
    $region22: #{tpu_custom_call.1} parent=1 // pred_check
      _
    $region23: #{tpu_custom_call.1} parent=1 // pred_check_branch
      %49 = sbr.rel (0) target = $region25
    $region24: #{tpu_custom_call.1} parent=1 // pred_region
      _
    $region25: #{tpu_custom_call.1} parent=1 // pred_fallthru
      _
    // Predicated region
    $region26: #{tpu_custom_call.1} parent=1 // pred_check
      _
    $region27: #{tpu_custom_call.1} parent=1 // pred_check_branch
      %51 = sbr.rel (0) target = $region29
    $region28: #{tpu_custom_call.1} parent=1 // pred_region
      _
    $region29: #{tpu_custom_call.1} parent=1 // pred_fallthru
      _
    // Predicated region
    $region30: #{tpu_custom_call.1} parent=1 // pred_check
      _
    $region31: #{tpu_custom_call.1} parent=1 // pred_check_branch
      %53 = sbr.rel (0) target = $region33
    $region32: #{tpu_custom_call.1} parent=1 // pred_region
      _
    $region33: #{tpu_custom_call.1} parent=1 // pred_fallthru
      _
    // Predicated region
    $region34: #{tpu_custom_call.1} parent=1 // pred_check
      _
    $region35: #{tpu_custom_call.1} parent=1 // pred_check_branch
      %55 = sbr.rel (0) target = $region37
    $region36: #{tpu_custom_call.1} parent=1 // pred_region
      %56 = dma.done [#allocation4], 2048
    $region37: #{tpu_custom_call.1} parent=1 // pred_fallthru
      _
    // Predicated region
    $region38: #{tpu_custom_call.1} parent=1 // pred_check
      _
    $region39: #{tpu_custom_call.1} parent=1 // pred_check_branch
      %58 = sbr.rel (0) target = $region41
    $region40: #{tpu_custom_call.1} parent=1 // pred_region
      %59 = dma.done [#allocation7], 256
    $region41: #{tpu_custom_call.1} parent=1 // pred_fallthru
      _
    %v61 = vld [vmem:[#allocation3] sm:$0xff]
    %v62 = vld [vmem:[#allocation3 + $0x8] sm:$0xff]
    %v63 = vld [vmem:[#allocation3 + $0x10] sm:$0xff]
    %v64 = vld [vmem:[#allocation3 + $0x18] sm:$0xff]
    %v65 = vld [vmem:[#allocation3 + $0x20] sm:$0xff]
    %v66 = vld [vmem:[#allocation3 + $0x28] sm:$0xff]
    %v67 = vld [vmem:[#allocation3 + $0x30] sm:$0xff]
    %v68 = vld [vmem:[#allocation3 + $0x38] sm:$0xff]
    %v69 = vld [vmem:[#allocation3 + $0x40] sm:$0xff]
    %v70 = vld [vmem:[#allocation3 + $0x48] sm:$0xff]
    %v71 = vld [vmem:[#allocation3 + $0x50] sm:$0xff]
    %v72 = vld [vmem:[#allocation3 + $0x58] sm:$0xff]
    %v73 = vld [vmem:[#allocation3 + $0x60] sm:$0xff]
    %v74 = vld [vmem:[#allocation3 + $0x68] sm:$0xff]
    %v75 = vld [vmem:[#allocation3 + $0x70] sm:$0xff]
    %v76 = vld [vmem:[#allocation3 + $0x78] sm:$0xff]
    %v77 = vpack.c.bf16 %v62, %v61
    %v78 = vpack.c.bf16 %v64, %v63
    %v79 = vpack.c.bf16 %v66, %v65
    %v80 = vpack.c.bf16 %v68, %v67
    %v81 = vpack.c.bf16 %v70, %v69
    %v82 = vpack.c.bf16 %v72, %v71
    %v83 = vpack.c.bf16 %v74, %v73
    %v84 = vpack.c.bf16 %v76, %v75
    %v85 = vld [vmem:[#allocation6] sm:$0xf]
    %v86 = vld [vmem:[#allocation6 + $0x4] sm:$0xf]
    %v87 = vld [vmem:[#allocation6 + $0x8] sm:$0xf]
    %v88 = vld [vmem:[#allocation6 + $0xc] sm:$0xf]
    %v89 = vld [vmem:[%s2] sm:$0x1]
    %v91 = vlaneseq
    %v92 = vshrl.u32 %v91, 7
    %v93 = vsub.s32 0, %v92
    %v94 = vrot.slane %v89, %v93
    %v100 = vunpack.c.l.b16 %v85
    %v101 = vunpack.c.l.b16 %v86
    %v102 = vunpack.c.l.b16 %v87
    %v103 = vunpack.c.l.b16 %v88
    %v104 = vpack.c.b16 %v101, %v100
    %v105 = vpack.c.b16 %v103, %v102
    %vm108 = vcmask 261120
    %v110 = vsel %vm108, %v77, 0
    %v113 = vsel %vm108, %v78, 0
    %v116 = vsel %vm108, %v79, 0
    %v119 = vsel %vm108, %v80, 0
    %v122 = vsel %vm108, %v81, 0
    %v125 = vsel %vm108, %v82, 0
    %v128 = vsel %vm108, %v83, 0
    %v131 = vsel %vm108, %v84, 0
    %133 = vmatprep.subr.bf16.mxu0 0
    %134 = vmatpush1.bf16.msra.mxu0 0
    %135 = vmatprep.subr.bf16.mxu0 0
    %136 = vmatpush1.bf16.msra.mxu0 0
    %137 = vmatprep.subr.bf16.mxu0 0
    %138 = vmatpush1.bf16.msra.mxu0 0
    %139 = vmatprep.subr.bf16.mxu0 0
    %140 = vmatpush1.bf16.msra.mxu0 0
    %141 = vmatprep.subr.bf16.mxu0 0
    %142 = vmatpush1.bf16.msra.mxu0 0
    %143 = vmatprep.subr.bf16.mxu0 0
    %144 = vmatpush1.bf16.msra.mxu0 0
    %145 = vmatprep.subr.bf16.mxu0 0
    %146 = vmatpush1.bf16.msra.mxu0 %v105
    %147 = vmatprep.subr.bf16.mxu0 0
    %148 = vmatpush1.bf16.msra.mxu0 %v104
    %149 = vmatprep.subr.bf16.mxu0 0
    %150 = vmatpush2.bf16.msra.mxu0 0
    %151 = vmatprep.subr.bf16.mxu0 0
    %152 = vmatpush2.bf16.msra.mxu0 0
    %153 = vmatprep.subr.bf16.mxu0 0
    %154 = vmatpush2.bf16.msra.mxu0 0
    %155 = vmatprep.subr.bf16.mxu0 0
    %156 = vmatpush2.bf16.msra.mxu0 0
    %157 = vmatprep.subr.bf16.mxu0 0
    %158 = vmatpush2.bf16.msra.mxu0 0
    %159 = vmatprep.subr.bf16.mxu0 0
    %160 = vmatpush2.bf16.msra.mxu0 0
    %161 = vmatprep.subr.bf16.mxu0 0
    %162 = vmatpush2.bf16.msra.mxu0 0
    %163 = vmatprep.subr.bf16.mxu0 0
    %164 = vmatpush2.bf16.msra.mxu0 0
    %165 = vmatprep.mubr.bf16.mxu0 0
    %166 = vmatmul.mubr.bf16.gmra.mxu0 %v110
    %v167 = vpop.f32.mrf.mxu0
    %v168 = vadd.f32 %v94, %v167
    %v169 = vpop.f32.mrf.mxu0
    %v170 = vpop.f32.mrf.mxu0
    %v171 = vadd.f32 %v94, %v170
    %v172 = vpop.f32.mrf.mxu0
    %173 = vmatprep.mubr.bf16.mxu0 0
    %174 = vmatmul.mubr.bf16.gmra.mxu0 %v113
    %v175 = vpop.f32.mrf.mxu0
    %v176 = vadd.f32 %v94, %v175
    %v177 = vpop.f32.mrf.mxu0
    %v178 = vpop.f32.mrf.mxu0
    %v179 = vadd.f32 %v94, %v178
    %v180 = vpop.f32.mrf.mxu0
    %181 = vmatprep.mubr.bf16.mxu0 0
    %182 = vmatmul.mubr.bf16.gmra.mxu0 %v116
    %v183 = vpop.f32.mrf.mxu0
    %v184 = vadd.f32 %v94, %v183
    %v185 = vpop.f32.mrf.mxu0
    %v186 = vpop.f32.mrf.mxu0
    %v187 = vadd.f32 %v94, %v186
    %v188 = vpop.f32.mrf.mxu0
    %189 = vmatprep.mubr.bf16.mxu0 0
    %190 = vmatmul.mubr.bf16.gmra.mxu0 %v119
    %v191 = vpop.f32.mrf.mxu0
    %v192 = vadd.f32 %v94, %v191
    %v193 = vpop.f32.mrf.mxu0
    %v194 = vpop.f32.mrf.mxu0
    %v195 = vadd.f32 %v94, %v194
    %v196 = vpop.f32.mrf.mxu0
    %197 = vmatprep.mubr.bf16.mxu0 0
    %198 = vmatmul.mubr.bf16.gmra.mxu0 %v122
    %v199 = vpop.f32.mrf.mxu0
    %v200 = vadd.f32 %v94, %v199
    %v201 = vpop.f32.mrf.mxu0
    %v202 = vpop.f32.mrf.mxu0
    %v203 = vadd.f32 %v94, %v202
    %v204 = vpop.f32.mrf.mxu0
    %205 = vmatprep.mubr.bf16.mxu0 0
    %206 = vmatmul.mubr.bf16.gmra.mxu0 %v125
    %v207 = vpop.f32.mrf.mxu0
    %v208 = vadd.f32 %v94, %v207
    %v209 = vpop.f32.mrf.mxu0
    %v210 = vpop.f32.mrf.mxu0
    %v211 = vadd.f32 %v94, %v210
    %v212 = vpop.f32.mrf.mxu0
    %213 = vmatprep.mubr.bf16.mxu0 0
    %214 = vmatmul.mubr.bf16.gmra.mxu0 %v128
    %v215 = vpop.f32.mrf.mxu0
    %v216 = vadd.f32 %v94, %v215
    %v217 = vpop.f32.mrf.mxu0
    %v218 = vpop.f32.mrf.mxu0
    %v219 = vadd.f32 %v94, %v218
    %v220 = vpop.f32.mrf.mxu0
    %221 = vmatprep.mubr.bf16.mxu0 0
    %222 = vmatmul.mubr.bf16.gmra.mxu0 %v131
    %v223 = vpop.f32.mrf.mxu0
    %v224 = vadd.f32 %v94, %v223
    %v225 = vpop.f32.mrf.mxu0
    %v226 = vpop.f32.mrf.mxu0
    %v227 = vadd.f32 %v94, %v226
    %v228 = vpop.f32.mrf.mxu0
    %229 = vdwg.mxu0
    %v230 = vmax.f32 %v168, 0.0
    %v231 = vmax.f32 %v171, 0.0
    %v232 = vmax.f32 %v176, 0.0
    %v233 = vmax.f32 %v179, 0.0
    %v234 = vmax.f32 %v184, 0.0
    %v235 = vmax.f32 %v187, 0.0
    %v236 = vmax.f32 %v192, 0.0
    %v237 = vmax.f32 %v195, 0.0
    %v238 = vmax.f32 %v200, 0.0
    %v239 = vmax.f32 %v203, 0.0
    %v240 = vmax.f32 %v208, 0.0
    %v241 = vmax.f32 %v211, 0.0
    %v242 = vmax.f32 %v216, 0.0
    %v243 = vmax.f32 %v219, 0.0
    %v244 = vmax.f32 %v224, 0.0
    %v245 = vmax.f32 %v227, 0.0
    %v246 = vpack.c.bf16 %v231, %v230
    %v247 = vpack.c.bf16 %v233, %v232
    %v248 = vpack.c.bf16 %v235, %v234
    %v249 = vpack.c.bf16 %v237, %v236
    %v250 = vpack.c.bf16 %v239, %v238
    %v251 = vpack.c.bf16 %v241, %v240
    %v252 = vpack.c.bf16 %v243, %v242
    %v253 = vpack.c.bf16 %v245, %v244
    %v254 = vld [vmem:[%s3] sm:$0xf]
    %v255 = vld [vmem:[%s3 + $0x4] sm:$0xf]
    %v256 = vld [vmem:[%s3 + $0x8] sm:$0xf]
    %v257 = vld [vmem:[%s3 + $0xc] sm:$0xf]
    %v258 = vld [vmem:[%s3 + $0x10] sm:$0xf]
    %v259 = vld [vmem:[%s3 + $0x14] sm:$0xf]
    %v260 = vld [vmem:[%s3 + $0x18] sm:$0xf]
    %v261 = vld [vmem:[%s3 + $0x1c] sm:$0xf]
    %v262 = vld [vmem:[%s3 + $0x20] sm:$0xf]
    %v263 = vld [vmem:[%s3 + $0x24] sm:$0xf]
    %v264 = vld [vmem:[%s3 + $0x28] sm:$0xf]
    %v265 = vld [vmem:[%s3 + $0x2c] sm:$0xf]
    %v266 = vld [vmem:[%s3 + $0x30] sm:$0xf]
    %v267 = vld [vmem:[%s3 + $0x34] sm:$0xf]
    %v268 = vld [vmem:[%s3 + $0x38] sm:$0xf]
    %v269 = vld [vmem:[%s3 + $0x3c] sm:$0xf]
    %v270 = vld [vmem:[%s4] sm:$0x1]
    %v272 = vlaneseq
    %v273 = vshrl.u32 %v272, 7
    %v274 = vsub.s32 0, %v273
    %v275 = vrot.slane %v270, %v274
    %v293 = vunpack.c.l.b16 %v254
    %v294 = vunpack.c.l.b16 %v255
    %v295 = vunpack.c.l.b16 %v256
    %v296 = vunpack.c.l.b16 %v257
    %v297 = vunpack.c.l.b16 %v258
    %v298 = vunpack.c.l.b16 %v259
    %v299 = vunpack.c.l.b16 %v260
    %v300 = vunpack.c.l.b16 %v261
    %v301 = vunpack.c.l.b16 %v262
    %v302 = vunpack.c.l.b16 %v263
    %v303 = vunpack.c.l.b16 %v264
    %v304 = vunpack.c.l.b16 %v265
    %v305 = vunpack.c.l.b16 %v266
    %v306 = vunpack.c.l.b16 %v267
    %v307 = vunpack.c.l.b16 %v268
    %v308 = vunpack.c.l.b16 %v269
    %v309 = vpack.c.b16 %v294, %v293
    %v310 = vpack.c.b16 %v296, %v295
    %v311 = vpack.c.b16 %v298, %v297
    %v312 = vpack.c.b16 %v300, %v299
    %v313 = vpack.c.b16 %v302, %v301
    %v314 = vpack.c.b16 %v304, %v303
    %v315 = vpack.c.b16 %v306, %v305
    %v316 = vpack.c.b16 %v308, %v307
    %325 = vmatprep.subr.bf16.mxu0 0
    %326 = vmatpush1.bf16.msra.mxu0 %v316
    %327 = vmatprep.subr.bf16.mxu0 0
    %328 = vmatpush1.bf16.msra.mxu0 %v315
    %329 = vmatprep.subr.bf16.mxu0 0
    %330 = vmatpush1.bf16.msra.mxu0 %v314
    %331 = vmatprep.subr.bf16.mxu0 0
    %332 = vmatpush1.bf16.msra.mxu0 %v313
    %333 = vmatprep.subr.bf16.mxu0 0
    %334 = vmatpush1.bf16.msra.mxu0 %v312
    %335 = vmatprep.subr.bf16.mxu0 0
    %336 = vmatpush1.bf16.msra.mxu0 %v311
    %337 = vmatprep.subr.bf16.mxu0 0
    %338 = vmatpush1.bf16.msra.mxu0 %v310
    %339 = vmatprep.subr.bf16.mxu0 0
    %340 = vmatpush1.bf16.msra.mxu0 %v309
    %341 = vmatprep.subr.bf16.mxu0 0
    %342 = vmatpush2.bf16.msra.mxu0 0
    %343 = vmatprep.subr.bf16.mxu0 0
    %344 = vmatpush2.bf16.msra.mxu0 0
    %345 = vmatprep.subr.bf16.mxu0 0
    %346 = vmatpush2.bf16.msra.mxu0 0
    %347 = vmatprep.subr.bf16.mxu0 0
    %348 = vmatpush2.bf16.msra.mxu0 0
    %349 = vmatprep.subr.bf16.mxu0 0
    %350 = vmatpush2.bf16.msra.mxu0 0
    %351 = vmatprep.subr.bf16.mxu0 0
    %352 = vmatpush2.bf16.msra.mxu0 0
    %353 = vmatprep.subr.bf16.mxu0 0
    %354 = vmatpush2.bf16.msra.mxu0 0
    %355 = vmatprep.subr.bf16.mxu0 0
    %356 = vmatpush2.bf16.msra.mxu0 0
    %357 = vmatprep.mubr.bf16.mxu0 0
    %358 = vmatmul.mubr.bf16.gmra.mxu0 %v246
    %v359 = vpop.f32.mrf.mxu0
    %v360 = vadd.f32 %v275, %v359
    %v361 = vpop.f32.mrf.mxu0
    %v362 = vpop.f32.mrf.mxu0
    %v363 = vadd.f32 %v275, %v362
    %v364 = vpop.f32.mrf.mxu0
    %365 = vmatprep.mubr.bf16.mxu0 0
    %366 = vmatmul.mubr.bf16.gmra.mxu0 %v247
    %v367 = vpop.f32.mrf.mxu0
    %v368 = vadd.f32 %v275, %v367
    %v369 = vpop.f32.mrf.mxu0
    %v370 = vpop.f32.mrf.mxu0
    %v371 = vadd.f32 %v275, %v370
    %v372 = vpop.f32.mrf.mxu0
    %373 = vmatprep.mubr.bf16.mxu0 0
    %374 = vmatmul.mubr.bf16.gmra.mxu0 %v248
    %v375 = vpop.f32.mrf.mxu0
    %v376 = vadd.f32 %v275, %v375
    %v377 = vpop.f32.mrf.mxu0
    %v378 = vpop.f32.mrf.mxu0
    %v379 = vadd.f32 %v275, %v378
    %v380 = vpop.f32.mrf.mxu0
    %381 = vmatprep.mubr.bf16.mxu0 0
    %382 = vmatmul.mubr.bf16.gmra.mxu0 %v249
    %v383 = vpop.f32.mrf.mxu0
    %v384 = vadd.f32 %v275, %v383
    %v385 = vpop.f32.mrf.mxu0
    %v386 = vpop.f32.mrf.mxu0
    %v387 = vadd.f32 %v275, %v386
    %v388 = vpop.f32.mrf.mxu0
    %389 = vmatprep.mubr.bf16.mxu0 0
    %390 = vmatmul.mubr.bf16.gmra.mxu0 %v250
    %v391 = vpop.f32.mrf.mxu0
    %v392 = vadd.f32 %v275, %v391
    %v393 = vpop.f32.mrf.mxu0
    %v394 = vpop.f32.mrf.mxu0
    %v395 = vadd.f32 %v275, %v394
    %v396 = vpop.f32.mrf.mxu0
    %397 = vmatprep.mubr.bf16.mxu0 0
    %398 = vmatmul.mubr.bf16.gmra.mxu0 %v251
    %v399 = vpop.f32.mrf.mxu0
    %v400 = vadd.f32 %v275, %v399
    %v401 = vpop.f32.mrf.mxu0
    %v402 = vpop.f32.mrf.mxu0
    %v403 = vadd.f32 %v275, %v402
    %v404 = vpop.f32.mrf.mxu0
    %405 = vmatprep.mubr.bf16.mxu0 0
    %406 = vmatmul.mubr.bf16.gmra.mxu0 %v252
    %v407 = vpop.f32.mrf.mxu0
    %v408 = vadd.f32 %v275, %v407
    %v409 = vpop.f32.mrf.mxu0
    %v410 = vpop.f32.mrf.mxu0
    %v411 = vadd.f32 %v275, %v410
    %v412 = vpop.f32.mrf.mxu0
    %413 = vmatprep.mubr.bf16.mxu0 0
    %414 = vmatmul.mubr.bf16.gmra.mxu0 %v253
    %v415 = vpop.f32.mrf.mxu0
    %v416 = vadd.f32 %v275, %v415
    %v417 = vpop.f32.mrf.mxu0
    %v418 = vpop.f32.mrf.mxu0
    %v419 = vadd.f32 %v275, %v418
    %v420 = vpop.f32.mrf.mxu0
    %421 = vdwg.mxu0
    %v422 = vmax.f32 %v360, 0.0
    %v423 = vmax.f32 %v363, 0.0
    %v424 = vmax.f32 %v368, 0.0
    %v425 = vmax.f32 %v371, 0.0
    %v426 = vmax.f32 %v376, 0.0
    %v427 = vmax.f32 %v379, 0.0
    %v428 = vmax.f32 %v384, 0.0
    %v429 = vmax.f32 %v387, 0.0
    %v430 = vmax.f32 %v392, 0.0
    %v431 = vmax.f32 %v395, 0.0
    %v432 = vmax.f32 %v400, 0.0
    %v433 = vmax.f32 %v403, 0.0
    %v434 = vmax.f32 %v408, 0.0
    %v435 = vmax.f32 %v411, 0.0
    %v436 = vmax.f32 %v416, 0.0
    %v437 = vmax.f32 %v419, 0.0
    %v438 = vpack.c.bf16 %v423, %v422
    %v439 = vpack.c.bf16 %v425, %v424
    %v440 = vpack.c.bf16 %v427, %v426
    %v441 = vpack.c.bf16 %v429, %v428
    %v442 = vpack.c.bf16 %v431, %v430
    %v443 = vpack.c.bf16 %v433, %v432
    %v444 = vpack.c.bf16 %v435, %v434
    %v445 = vpack.c.bf16 %v437, %v436
    %v446 = vld [vmem:[%s5] sm:$0xf]
    %v447 = vld [vmem:[%s5 + $0x4] sm:$0xf]
    %v448 = vld [vmem:[%s5 + $0x8] sm:$0xf]
    %v449 = vld [vmem:[%s5 + $0xc] sm:$0xf]
    %v450 = vld [vmem:[%s5 + $0x10] sm:$0xf]
    %v451 = vld [vmem:[%s5 + $0x14] sm:$0xf]
    %v452 = vld [vmem:[%s5 + $0x18] sm:$0xf]
    %v453 = vld [vmem:[%s5 + $0x1c] sm:$0xf]
    %v454 = vld [vmem:[%s5 + $0x20] sm:$0xf]
    %v455 = vld [vmem:[%s5 + $0x24] sm:$0xf]
    %v456 = vld [vmem:[%s5 + $0x28] sm:$0xf]
    %v457 = vld [vmem:[%s5 + $0x2c] sm:$0xf]
    %v458 = vld [vmem:[%s5 + $0x30] sm:$0xf]
    %v459 = vld [vmem:[%s5 + $0x34] sm:$0xf]
    %v460 = vld [vmem:[%s5 + $0x38] sm:$0xf]
    %v461 = vld [vmem:[%s5 + $0x3c] sm:$0xf]
    %v478 = vunpack.c.l.b16 %v446
    %v479 = vunpack.c.l.b16 %v447
    %v480 = vunpack.c.l.b16 %v448
    %v481 = vunpack.c.l.b16 %v449
    %v482 = vunpack.c.l.b16 %v450
    %v483 = vunpack.c.l.b16 %v451
    %v484 = vunpack.c.l.b16 %v452
    %v485 = vunpack.c.l.b16 %v453
    %v486 = vunpack.c.l.b16 %v454
    %v487 = vunpack.c.l.b16 %v455
    %v488 = vunpack.c.l.b16 %v456
    %v489 = vunpack.c.l.b16 %v457
    %v490 = vunpack.c.l.b16 %v458
    %v491 = vunpack.c.l.b16 %v459
    %v492 = vunpack.c.l.b16 %v460
    %v493 = vunpack.c.l.b16 %v461
    %v494 = vpack.c.b16 %v479, %v478
    %v495 = vpack.c.b16 %v481, %v480
    %v496 = vpack.c.b16 %v483, %v482
    %v497 = vpack.c.b16 %v485, %v484
    %v498 = vpack.c.b16 %v487, %v486
    %v499 = vpack.c.b16 %v489, %v488
    %v500 = vpack.c.b16 %v491, %v490
    %v501 = vpack.c.b16 %v493, %v492
    %510 = vmatprep.subr.bf16.mxu0 0
    %511 = vmatpush1.bf16.msra.mxu0 %v501
    %512 = vmatprep.subr.bf16.mxu0 0
    %513 = vmatpush1.bf16.msra.mxu0 %v500
    %514 = vmatprep.subr.bf16.mxu0 0
    %515 = vmatpush1.bf16.msra.mxu0 %v499
    %516 = vmatprep.subr.bf16.mxu0 0
    %517 = vmatpush1.bf16.msra.mxu0 %v498
    %518 = vmatprep.subr.bf16.mxu0 0
    %519 = vmatpush1.bf16.msra.mxu0 %v497
    %520 = vmatprep.subr.bf16.mxu0 0
    %521 = vmatpush1.bf16.msra.mxu0 %v496
    %522 = vmatprep.subr.bf16.mxu0 0
    %523 = vmatpush1.bf16.msra.mxu0 %v495
    %524 = vmatprep.subr.bf16.mxu0 0
    %525 = vmatpush1.bf16.msra.mxu0 %v494
    %526 = vmatprep.subr.bf16.mxu0 0
    %527 = vmatpush2.bf16.msra.mxu0 0
    %528 = vmatprep.subr.bf16.mxu0 0
    %529 = vmatpush2.bf16.msra.mxu0 0
    %530 = vmatprep.subr.bf16.mxu0 0
    %531 = vmatpush2.bf16.msra.mxu0 0
    %532 = vmatprep.subr.bf16.mxu0 0
    %533 = vmatpush2.bf16.msra.mxu0 0
    %534 = vmatprep.subr.bf16.mxu0 0
    %535 = vmatpush2.bf16.msra.mxu0 0
    %536 = vmatprep.subr.bf16.mxu0 0
    %537 = vmatpush2.bf16.msra.mxu0 0
    %538 = vmatprep.subr.bf16.mxu0 0
    %539 = vmatpush2.bf16.msra.mxu0 0
    %540 = vmatprep.subr.bf16.mxu0 0
    %541 = vmatpush2.bf16.msra.mxu0 0
    %542 = vmatprep.mubr.bf16.mxu0 0
    %543 = vmatmul.mubr.bf16.gmra.mxu0 %v438
    %v544 = vpop.f32.mrf.mxu0
    %v545 = vadd.f32 0.0, %v544
    %v546 = vpop.f32.mrf.mxu0
    %v547 = vpop.f32.mrf.mxu0
    %v548 = vadd.f32 0.0, %v547
    %v549 = vpop.f32.mrf.mxu0
    %550 = vmatprep.mubr.bf16.mxu0 0
    %551 = vmatmul.mubr.bf16.gmra.mxu0 %v439
    %v552 = vpop.f32.mrf.mxu0
    %v553 = vadd.f32 0.0, %v552
    %v554 = vpop.f32.mrf.mxu0
    %v555 = vpop.f32.mrf.mxu0
    %v556 = vadd.f32 0.0, %v555
    %v557 = vpop.f32.mrf.mxu0
    %558 = vmatprep.mubr.bf16.mxu0 0
    %559 = vmatmul.mubr.bf16.gmra.mxu0 %v440
    %v560 = vpop.f32.mrf.mxu0
    %v561 = vadd.f32 0.0, %v560
    %v562 = vpop.f32.mrf.mxu0
    %v563 = vpop.f32.mrf.mxu0
    %v564 = vadd.f32 0.0, %v563
    %v565 = vpop.f32.mrf.mxu0
    %566 = vmatprep.mubr.bf16.mxu0 0
    %567 = vmatmul.mubr.bf16.gmra.mxu0 %v441
    %v568 = vpop.f32.mrf.mxu0
    %v569 = vadd.f32 0.0, %v568
    %v570 = vpop.f32.mrf.mxu0
    %v571 = vpop.f32.mrf.mxu0
    %v572 = vadd.f32 0.0, %v571
    %v573 = vpop.f32.mrf.mxu0
    %574 = vmatprep.mubr.bf16.mxu0 0
    %575 = vmatmul.mubr.bf16.gmra.mxu0 %v442
    %v576 = vpop.f32.mrf.mxu0
    %v577 = vadd.f32 0.0, %v576
    %v578 = vpop.f32.mrf.mxu0
    %v579 = vpop.f32.mrf.mxu0
    %v580 = vadd.f32 0.0, %v579
    %v581 = vpop.f32.mrf.mxu0
    %582 = vmatprep.mubr.bf16.mxu0 0
    %583 = vmatmul.mubr.bf16.gmra.mxu0 %v443
    %v584 = vpop.f32.mrf.mxu0
    %v585 = vadd.f32 0.0, %v584
    %v586 = vpop.f32.mrf.mxu0
    %v587 = vpop.f32.mrf.mxu0
    %v588 = vadd.f32 0.0, %v587
    %v589 = vpop.f32.mrf.mxu0
    %590 = vmatprep.mubr.bf16.mxu0 0
    %591 = vmatmul.mubr.bf16.gmra.mxu0 %v444
    %v592 = vpop.f32.mrf.mxu0
    %v593 = vadd.f32 0.0, %v592
    %v594 = vpop.f32.mrf.mxu0
    %v595 = vpop.f32.mrf.mxu0
    %v596 = vadd.f32 0.0, %v595
    %v597 = vpop.f32.mrf.mxu0
    %598 = vmatprep.mubr.bf16.mxu0 0
    %599 = vmatmul.mubr.bf16.gmra.mxu0 %v445
    %v600 = vpop.f32.mrf.mxu0
    %v601 = vadd.f32 0.0, %v600
    %v602 = vpop.f32.mrf.mxu0
    %v603 = vpop.f32.mrf.mxu0
    %v604 = vadd.f32 0.0, %v603
    %v605 = vpop.f32.mrf.mxu0
    %606 = vdwg.mxu0
    %v607 = vld [vmem:[%s6] sm:$0xf]
    %v608 = vpack.c.bf16 %v548, %v545
    %v609 = vpack.c.bf16 %v556, %v553
    %v610 = vpack.c.bf16 %v564, %v561
    %v611 = vpack.c.bf16 %v572, %v569
    %v612 = vpack.c.bf16 %v580, %v577
    %v613 = vpack.c.bf16 %v588, %v585
    %v614 = vpack.c.bf16 %v596, %v593
    %v615 = vpack.c.bf16 %v604, %v601
    %vm616 = vcmask 64512
    %v618 = vsel %vm616, %v607, 0
    %v621 = vsel %vm616, %v608, 0
    %v624 = vsel %vm616, %v609, 0
    %v627 = vsel %vm616, %v610, 0
    %v630 = vsel %vm616, %v611, 0
    %v633 = vsel %vm616, %v612, 0
    %v636 = vsel %vm616, %v613, 0
    %v639 = vsel %vm616, %v614, 0
    %v642 = vsel %vm616, %v615, 0
    %644 = vmatprep.subr.bf16.mxu0 0
    %645 = vmatpush1.bf16.xpose.msra.mxu0 %v642
    %646 = vmatprep.subr.bf16.mxu0 0
    %647 = vmatpush1.bf16.xpose.msra.mxu0 %v639
    %648 = vmatprep.subr.bf16.mxu0 0
    %649 = vmatpush1.bf16.xpose.msra.mxu0 %v636
    %650 = vmatprep.subr.bf16.mxu0 0
    %651 = vmatpush1.bf16.xpose.msra.mxu0 %v633
    %652 = vmatprep.subr.bf16.mxu0 0
    %653 = vmatpush1.bf16.xpose.msra.mxu0 %v630
    %654 = vmatprep.subr.bf16.mxu0 0
    %655 = vmatpush1.bf16.xpose.msra.mxu0 %v627
    %656 = vmatprep.subr.bf16.mxu0 0
    %657 = vmatpush1.bf16.xpose.msra.mxu0 %v624
    %658 = vmatprep.subr.bf16.mxu0 0
    %659 = vmatpush1.bf16.xpose.msra.mxu0 %v621
    %660 = vmatprep.subr.bf16.mxu0 0
    %661 = vmatpush2.bf16.xpose.msra.mxu0 0
    %662 = vmatprep.subr.bf16.mxu0 0
    %663 = vmatpush2.bf16.xpose.msra.mxu0 0
    %664 = vmatprep.subr.bf16.mxu0 0
    %665 = vmatpush2.bf16.xpose.msra.mxu0 0
    %666 = vmatprep.subr.bf16.mxu0 0
    %667 = vmatpush2.bf16.xpose.msra.mxu0 0
    %668 = vmatprep.subr.bf16.mxu0 0
    %669 = vmatpush2.bf16.xpose.msra.mxu0 0
    %670 = vmatprep.subr.bf16.mxu0 0
    %671 = vmatpush2.bf16.xpose.msra.mxu0 0
    %672 = vmatprep.subr.bf16.mxu0 0
    %673 = vmatpush2.bf16.xpose.msra.mxu0 0
    %674 = vmatprep.subr.bf16.mxu0 0
    %675 = vmatpush2.bf16.xpose.msra.mxu0 0
    %676 = vmatprep.mubr.bf16.mxu0 0
    %677 = vmatmul.mubr.bf16.gmra.mxu0 %v618
    %v678 = vpop.f32.mrf.mxu0
    %v679 = vadd.f32 0.0, %v678
    %v680 = vpop.f32.mrf.mxu0
    %v681 = vpop.f32.mrf.mxu0
    %v682 = vpop.f32.mrf.mxu0
    %683 = vdwg.mxu0
    %v684 = vld [vmem:[#allocation2] sm:$0x1]
    %686 = vset.pattern.permute.xlu0 0
    %687 = vperm.xlu0 %686, %v684
    %v688 = vpop.permute.xlu0 %687
    %v690 = vlaneseq
    %v691 = vshrl.u32 %v690, 7
    %v692 = vsub.s32 0, %v691
    %v693 = vrot.slane %v688, %v692
    %v694 = vadd.f32 %v679, %v693
    %695 = vst [vmem:[#allocation8] sm:$0x1] %v694
    // Predicated region
    $region42: #{tpu_custom_call.1} parent=1 // pred_check
      _
    $region43: #{tpu_custom_call.1} parent=1 // pred_check_branch
      %697 = sbr.rel (0) target = $region45
    $region44: #{tpu_custom_call.1} parent=1 // pred_region
      %s699 = ssub.s32 16, 16
      %700 = vsyncadd [#allocation5], %s699
      %s702 = sshll.u32 [#allocation8], 4
      %s703 = int_to_ptr.vmem [resolvable:$true] %s702
      %705 = dma.vmem_to_hbm [thread:$0]  %s703, 16, %s8, [#allocation5]
    $region45: #{tpu_custom_call.1} parent=1 // pred_fallthru
      _
    // Predicated region
    $region46: #{tpu_custom_call.1} parent=1 // pred_check
      _
    $region47: #{tpu_custom_call.1} parent=1 // pred_check_branch
      %707 = sbr.rel (0) target = $region49
    $region48: #{tpu_custom_call.1} parent=1 // pred_region
      %708 = dma.done [#allocation5], 16
    $region49: #{tpu_custom_call.1} parent=1 // pred_fallthru
      _
    %709 = vsyncpa [#allocation4], 1
    %710 = vsyncpa [#allocation7], 1
    %711 = vsyncpa [#allocation5], 1

</llo_original>
